<compile_context>
chip_gen: v5e
topology: v5e:2x2
jax: 0.10.0
libtpu: 0.0.40
codegen_flags: <defaults>
</compile_context>

<pallas_src>
import functools

import jax
import jax.numpy as jnp
from jax.experimental import pallas as pl
from jax.experimental.pallas import tpu as pltpu


SHAPE = 2          # feature dim of z (as in NICE(shape=2))
HALF = SHAPE // 2  # = 1
HIDDEN = 32
LANE = 128         # batch-tile granularity (vreg lane width)


def _nice_kernel(zt_ref, abs_s_ref,
                 w1a_ref, b1a_ref, w1b_ref, b1b_ref, w1c_ref, b1c_ref,
                 w2a_ref, b2a_ref, w2b_ref, b2b_ref, w2c_ref, b2c_ref,
                 out_ref):
    """One batch tile: zt_ref is (2, B_TILE) with batch on the lane axis."""
    zt = zt_ref[...]
    z1 = zt[0:HALF, :]            # (1, Bt)
    z2 = zt[HALF:SHAPE, :]        # (1, Bt)

    def mlp(x, wa, ba, wb, bb, wc, bc):
        # 1 -> 32: outer product -> VPU broadcast multiply (MXU would be <1% full).
        h = jnp.maximum(wa * x + ba, 0.0)                    # (32, Bt)
        # 32 -> 32: the only real matmul, keep it on the MXU.
        h = jnp.dot(wb, h, preferred_element_type=jnp.float32) + bb
        h = jnp.maximum(h, 0.0)                              # (32, Bt)
        # 32 -> 1: dot-with-a-vector -> multiply + sublane reduce (XLU).
        return jnp.sum(wc * h, axis=0, keepdims=True) + bc   # (1, Bt)

    # z2 = z2 + mlp1(z1)
    z2 = z2 + mlp(z1, w1a_ref[...], b1a_ref[...], w1b_ref[...], b1b_ref[...],
                  w1c_ref[...], b1c_ref[...])
    # z1 = z1 + mlp2(z2)
    z1 = z1 + mlp(z2, w2a_ref[...], b2a_ref[...], w2b_ref[...], b2b_ref[...],
                  w2c_ref[...], b2c_ref[...])

    # z = cat([z1, z2]) * abs(s): lane-dense (2, B_TILE) store.
    out_ref[...] = jnp.concatenate([z1, z2], axis=0) * abs_s_ref[...]


def _const_spec(shape):
    """Whole-array block that stays resident across the batch grid."""
    zeros = (0,) * len(shape)
    return pl.BlockSpec(shape, lambda i, zeros=zeros: zeros)


@functools.partial(jax.jit, static_argnames=("b_tile",))
def nice_forward(z, params, *, b_tile=8192):
    """z: (B, 2) float32.  Returns (z_out (B, 2), log_det scalar)."""
    B = z.shape[0]
    assert z.shape[1] == SHAPE
    assert b_tile % LANE == 0

    # Shrink the tile for small batches (keep it a multiple of the lane width).
    bt = min(b_tile, pl.cdiv(B, LANE) * LANE)
    padded_b = pl.cdiv(B, bt) * bt
    grid = (padded_b // bt,)

    # ---- layout plumbing (all in the wrapper, outside the kernel) ----
    zt = jnp.zeros((SHAPE, padded_b), jnp.float32).at[:, :B].set(z.T)

    # Pre-transpose weights so the kernel computes W @ x; pre-reshape biases to
    # column vectors; precompute abs(s) once (hoisted out of the grid loop).
    abs_s = jnp.abs(params["s"]).reshape(SHAPE, 1)           # (2, 1)
    w1a = params["w1a"].T                                    # (32, 1)
    b1a = params["b1a"].T                                    # (32, 1)
    w1b = params["w1b"].T                                    # (32, 32)
    b1b = params["b1b"].T                                    # (32, 1)
    w1c = params["w1c"]                                      # (32, 1)
    b1c = params["b1c"]                                      # (1, 1)
    w2a = params["w2a"].T
    b2a = params["b2a"].T
    w2b = params["w2b"].T
    b2b = params["b2b"].T
    w2c = params["w2c"]
    b2c = params["b2c"]

    consts = (abs_s, w1a, b1a, w1b, b1b, w1c, b1c,
              w2a, b2a, w2b, b2b, w2c, b2c)

    zt_spec = pl.BlockSpec((SHAPE, bt), lambda i: (0, i))
    in_specs = [zt_spec] + [_const_spec(c.shape) for c in consts]

    out_t = pl.pallas_call(
        _nice_kernel,
        out_shape=jax.ShapeDtypeStruct((SHAPE, padded_b), jnp.float32),
        grid=grid,
        in_specs=in_specs,
        out_specs=pl.BlockSpec((SHAPE, bt), lambda i: (0, i)),
        compiler_params=pltpu.CompilerParams(
            dimension_semantics=("parallel",)),
    )(zt, *consts)

    z_out = out_t.T[:B]
    # log_det only depends on the 2-element s -> plain JAX, not per-tile work.
    log_det = jnp.sum(jnp.log(jnp.abs(params["s"])))
    return z_out, log_det


def init_params(key):
    """Deterministic synthetic init (mimics nn.Linear uniform bounds, s ~ randn)."""
    keys = jax.random.split(key, 16)

    def linear(kw, kb, fan_in, fan_out):
        bound = 1.0 / jnp.sqrt(jnp.float32(fan_in))
        w = jax.random.uniform(kw, (fan_in, fan_out), jnp.float32, -bound, bound)
        b = jax.random.uniform(kb, (1, fan_out), jnp.float32, -bound, bound)
        return w, b

    p = {}
    p["s"] = jax.random.normal(keys[0], (1, SHAPE), jnp.float32)
    # mlp1: Linear(1,32), Linear(32,32), Linear(32,1)
    p["w1a"], p["b1a"] = linear(keys[1], keys[2], HALF, HIDDEN)
    p["w1b"], p["b1b"] = linear(keys[3], keys[4], HIDDEN, HIDDEN)
    p["w1c"], p["b1c"] = linear(keys[5], keys[6], HIDDEN, HALF)
    # mlp2: same shapes
    p["w2a"], p["b2a"] = linear(keys[7], keys[8], HALF, HIDDEN)
    p["w2b"], p["b2b"] = linear(keys[9], keys[10], HIDDEN, HIDDEN)
    p["w2c"], p["b2c"] = linear(keys[11], keys[12], HIDDEN, HALF)
    return p


def nice_reference(z, p):
    """Pure-JAX reference of the PyTorch forward for a sanity check."""
    def mlp(x, wa, ba, wb, bb, wc, bc):
        h = jnp.maximum(x @ wa + ba, 0.0)
        h = jnp.maximum(h @ wb + bb, 0.0)
        return h @ wc + bc

    z1, z2 = z[:, 0:HALF], z[:, HALF:SHAPE]
    z2 = z2 + mlp(z1, p["w1a"], p["b1a"], p["w1b"], p["b1b"], p["w1c"], p["b1c"])
    z1 = z1 + mlp(z2, p["w2a"], p["b2a"], p["w2b"], p["b2b"], p["w2c"], p["b2c"])
    zc = jnp.concatenate([z1, z2], axis=1) * jnp.abs(p["s"])
    log_det = jnp.sum(jnp.log(jnp.abs(p["s"])))
    return zc, log_det


if __name__ == "__main__":
    key = jax.random.PRNGKey(0)
    k_params, k_z_small, k_z_multi = jax.random.split(key, 3)
    params = init_params(k_params)

    # (batch, requested tile): small single-tile case + a multi-grid-step case.
    cases = [(8, 8192, k_z_small), (300, 128, k_z_multi)]
    for B, bt, kz in cases:
        z = jax.random.normal(kz, (B, SHAPE), jnp.float32)
        z_out, log_det = nice_forward(z, params, b_tile=bt)
        z_out = jax.block_until_ready(z_out)
        log_det = jax.block_until_ready(log_det)

        z_ref, ld_ref = nice_reference(z, params)
        assert z_out.shape == (B, SHAPE)
        assert jnp.allclose(z_out, z_ref, atol=1e-5, rtol=1e-5), f"z mismatch (B={B})"
        assert jnp.allclose(log_det, ld_ref, atol=1e-5, rtol=1e-5), f"log_det mismatch (B={B})"

    print("KERNEL_OK")
</pallas_src>

<mosaic_0001>
module attributes {stable_mosaic.version = 11 : i64} {
  func.func @_nice_kernel(%arg0: i32, %arg1: memref<2x128xf32, #tpu.memory_space<vmem>>, %arg2: memref<2x1xf32, #tpu.memory_space<vmem>>, %arg3: memref<32x1xf32, #tpu.memory_space<vmem>>, %arg4: memref<32x1xf32, #tpu.memory_space<vmem>>, %arg5: memref<32x32xf32, #tpu.memory_space<vmem>>, %arg6: memref<32x1xf32, #tpu.memory_space<vmem>>, %arg7: memref<32x1xf32, #tpu.memory_space<vmem>>, %arg8: memref<1x1xf32, #tpu.memory_space<vmem>>, %arg9: memref<32x1xf32, #tpu.memory_space<vmem>>, %arg10: memref<32x1xf32, #tpu.memory_space<vmem>>, %arg11: memref<32x32xf32, #tpu.memory_space<vmem>>, %arg12: memref<32x1xf32, #tpu.memory_space<vmem>>, %arg13: memref<32x1xf32, #tpu.memory_space<vmem>>, %arg14: memref<1x1xf32, #tpu.memory_space<vmem>>, %arg15: memref<2x128xf32, #tpu.memory_space<vmem>>) attributes {dimension_semantics = [#tpu.dimension_semantics<parallel>], iteration_bounds = array<i64: 1>, scalar_prefetch = 0 : i64, scratch_operands = 0 : i64, tpu.core_type = #tpu.core_type<tc>, window_params = [{transform_indices = @transform_0, window_bounds = array<i64: 2, 128>}, {pipeline_mode = #tpu.pipeline_mode<synchronous>, transform_indices = @transform_1, window_bounds = array<i64: 2, 1>}, {pipeline_mode = #tpu.pipeline_mode<synchronous>, transform_indices = @transform_2, window_bounds = array<i64: 32, 1>}, {pipeline_mode = #tpu.pipeline_mode<synchronous>, transform_indices = @transform_3, window_bounds = array<i64: 32, 1>}, {pipeline_mode = #tpu.pipeline_mode<synchronous>, transform_indices = @transform_4, window_bounds = array<i64: 32, 32>}, {pipeline_mode = #tpu.pipeline_mode<synchronous>, transform_indices = @transform_5, window_bounds = array<i64: 32, 1>}, {pipeline_mode = #tpu.pipeline_mode<synchronous>, transform_indices = @transform_6, window_bounds = array<i64: 32, 1>}, {pipeline_mode = #tpu.pipeline_mode<synchronous>, transform_indices = @transform_7, window_bounds = array<i64: 1, 1>}, {pipeline_mode = #tpu.pipeline_mode<synchronous>, transform_indices = @transform_8, window_bounds = array<i64: 32, 1>}, {pipeline_mode = #tpu.pipeline_mode<synchronous>, transform_indices = @transform_9, window_bounds = array<i64: 32, 1>}, {pipeline_mode = #tpu.pipeline_mode<synchronous>, transform_indices = @transform_10, window_bounds = array<i64: 32, 32>}, {pipeline_mode = #tpu.pipeline_mode<synchronous>, transform_indices = @transform_11, window_bounds = array<i64: 32, 1>}, {pipeline_mode = #tpu.pipeline_mode<synchronous>, transform_indices = @transform_12, window_bounds = array<i64: 32, 1>}, {pipeline_mode = #tpu.pipeline_mode<synchronous>, transform_indices = @transform_13, window_bounds = array<i64: 1, 1>}, {transform_indices = @transform_14, window_bounds = array<i64: 2, 128>}]} {
    %c0 = arith.constant 0 : index
    %c0_0 = arith.constant 0 : index
    %0 = vector.load %arg1[%c0, %c0_0] : memref<2x128xf32, #tpu.memory_space<vmem>>, vector<2x128xf32>
    %1 = vector.extract_strided_slice %0 {offsets = [0, 0], sizes = [1, 128], strides = [1, 1]} : vector<2x128xf32> to vector<1x128xf32>
    %2 = vector.extract_strided_slice %0 {offsets = [1, 0], sizes = [1, 128], strides = [1, 1]} : vector<2x128xf32> to vector<1x128xf32>
    %c0_1 = arith.constant 0 : index
    %c0_2 = arith.constant 0 : index
    %3 = vector.load %arg3[%c0_1, %c0_2] : memref<32x1xf32, #tpu.memory_space<vmem>>, vector<32x1xf32>
    %c0_3 = arith.constant 0 : index
    %c0_4 = arith.constant 0 : index
    %4 = vector.load %arg4[%c0_3, %c0_4] : memref<32x1xf32, #tpu.memory_space<vmem>>, vector<32x1xf32>
    %c0_5 = arith.constant 0 : index
    %c0_6 = arith.constant 0 : index
    %5 = vector.load %arg5[%c0_5, %c0_6] : memref<32x32xf32, #tpu.memory_space<vmem>>, vector<32x32xf32>
    %c0_7 = arith.constant 0 : index
    %c0_8 = arith.constant 0 : index
    %6 = vector.load %arg6[%c0_7, %c0_8] : memref<32x1xf32, #tpu.memory_space<vmem>>, vector<32x1xf32>
    %c0_9 = arith.constant 0 : index
    %c0_10 = arith.constant 0 : index
    %7 = vector.load %arg7[%c0_9, %c0_10] : memref<32x1xf32, #tpu.memory_space<vmem>>, vector<32x1xf32>
    %c0_11 = arith.constant 0 : index
    %c0_12 = arith.constant 0 : index
    %8 = vector.load %arg8[%c0_11, %c0_12] : memref<1x1xf32, #tpu.memory_space<vmem>>, vector<1x1xf32>
    %9 = vector.broadcast %3 : vector<32x1xf32> to vector<32x128xf32>
    %10 = vector.broadcast %1 : vector<1x128xf32> to vector<32x128xf32>
    %11 = arith.mulf %9, %10 : vector<32x128xf32>
    %12 = vector.broadcast %4 : vector<32x1xf32> to vector<32x128xf32>
    %13 = arith.addf %11, %12 : vector<32x128xf32>
    %cst = arith.constant 0.000000e+00 : f32
    %14 = vector.broadcast %cst : f32 to vector<32x128xf32>
    %15 = arith.maximumf %13, %14 : vector<32x128xf32>
    %cst_13 = arith.constant dense<0.000000e+00> : vector<32x128xf32>
    %16 = tpu.matmul %5, %15, %cst_13 {dimension_numbers = #tpu.dot_dimension_numbers<[1], [0], [0], [1], [0, 0, 1, 1], [], []>} : vector<32x32xf32>, vector<32x128xf32>, vector<32x128xf32> -> vector<32x128xf32>
    %17 = vector.broadcast %6 : vector<32x1xf32> to vector<32x128xf32>
    %18 = arith.addf %16, %17 : vector<32x128xf32>
    %cst_14 = arith.constant 0.000000e+00 : f32
    %19 = vector.broadcast %cst_14 : f32 to vector<32x128xf32>
    %20 = arith.maximumf %18, %19 : vector<32x128xf32>
    %21 = vector.broadcast %7 : vector<32x1xf32> to vector<32x128xf32>
    %22 = arith.mulf %21, %20 : vector<32x128xf32>
    %cst_15 = arith.constant dense<0.000000e+00> : vector<128xf32>
    %23 = vector.multi_reduction <add>, %22, %cst_15 [0] : vector<32x128xf32> to vector<128xf32>
    %24 = vector.shape_cast %23 : vector<128xf32> to vector<1x128xf32>
    %25 = vector.broadcast %8 : vector<1x1xf32> to vector<1x128xf32>
    %26 = arith.addf %24, %25 : vector<1x128xf32>
    %27 = arith.addf %2, %26 : vector<1x128xf32>
    %c0_16 = arith.constant 0 : index
    %c0_17 = arith.constant 0 : index
    %28 = vector.load %arg9[%c0_16, %c0_17] : memref<32x1xf32, #tpu.memory_space<vmem>>, vector<32x1xf32>
    %c0_18 = arith.constant 0 : index
    %c0_19 = arith.constant 0 : index
    %29 = vector.load %arg10[%c0_18, %c0_19] : memref<32x1xf32, #tpu.memory_space<vmem>>, vector<32x1xf32>
    %c0_20 = arith.constant 0 : index
    %c0_21 = arith.constant 0 : index
    %30 = vector.load %arg11[%c0_20, %c0_21] : memref<32x32xf32, #tpu.memory_space<vmem>>, vector<32x32xf32>
    %c0_22 = arith.constant 0 : index
    %c0_23 = arith.constant 0 : index
    %31 = vector.load %arg12[%c0_22, %c0_23] : memref<32x1xf32, #tpu.memory_space<vmem>>, vector<32x1xf32>
    %c0_24 = arith.constant 0 : index
    %c0_25 = arith.constant 0 : index
    %32 = vector.load %arg13[%c0_24, %c0_25] : memref<32x1xf32, #tpu.memory_space<vmem>>, vector<32x1xf32>
    %c0_26 = arith.constant 0 : index
    %c0_27 = arith.constant 0 : index
    %33 = vector.load %arg14[%c0_26, %c0_27] : memref<1x1xf32, #tpu.memory_space<vmem>>, vector<1x1xf32>
    %34 = vector.broadcast %28 : vector<32x1xf32> to vector<32x128xf32>
    %35 = vector.broadcast %27 : vector<1x128xf32> to vector<32x128xf32>
    %36 = arith.mulf %34, %35 : vector<32x128xf32>
    %37 = vector.broadcast %29 : vector<32x1xf32> to vector<32x128xf32>
    %38 = arith.addf %36, %37 : vector<32x128xf32>
    %cst_28 = arith.constant 0.000000e+00 : f32
    %39 = vector.broadcast %cst_28 : f32 to vector<32x128xf32>
    %40 = arith.maximumf %38, %39 : vector<32x128xf32>
    %cst_29 = arith.constant dense<0.000000e+00> : vector<32x128xf32>
    %41 = tpu.matmul %30, %40, %cst_29 {dimension_numbers = #tpu.dot_dimension_numbers<[1], [0], [0], [1], [0, 0, 1, 1], [], []>} : vector<32x32xf32>, vector<32x128xf32>, vector<32x128xf32> -> vector<32x128xf32>
    %42 = vector.broadcast %31 : vector<32x1xf32> to vector<32x128xf32>
    %43 = arith.addf %41, %42 : vector<32x128xf32>
    %cst_30 = arith.constant 0.000000e+00 : f32
    %44 = vector.broadcast %cst_30 : f32 to vector<32x128xf32>
    %45 = arith.maximumf %43, %44 : vector<32x128xf32>
    %46 = vector.broadcast %32 : vector<32x1xf32> to vector<32x128xf32>
    %47 = arith.mulf %46, %45 : vector<32x128xf32>
    %cst_31 = arith.constant dense<0.000000e+00> : vector<128xf32>
    %48 = vector.multi_reduction <add>, %47, %cst_31 [0] : vector<32x128xf32> to vector<128xf32>
    %49 = vector.shape_cast %48 : vector<128xf32> to vector<1x128xf32>
    %50 = vector.broadcast %33 : vector<1x1xf32> to vector<1x128xf32>
    %51 = arith.addf %49, %50 : vector<1x128xf32>
    %52 = arith.addf %1, %51 : vector<1x128xf32>
    %53 = tpu.concatenate %52, %27 in 0 : vector<1x128xf32>, vector<1x128xf32> -> vector<2x128xf32>
    %c0_32 = arith.constant 0 : index
    %c0_33 = arith.constant 0 : index
    %54 = vector.load %arg2[%c0_32, %c0_33] : memref<2x1xf32, #tpu.memory_space<vmem>>, vector<2x1xf32>
    %55 = vector.broadcast %54 : vector<2x1xf32> to vector<2x128xf32>
    %56 = arith.mulf %53, %55 : vector<2x128xf32>
    %c0_34 = arith.constant 0 : index
    %c0_35 = arith.constant 0 : index
    %57 = vector.load %arg15[%c0_34, %c0_35] : memref<2x128xf32, #tpu.memory_space<vmem>>, vector<2x128xf32>
    tpu.vector_store %arg15[%c0_34, %c0_35], %56 {strides = array<i32>} : memref<2x128xf32, #tpu.memory_space<vmem>>, vector<2x128xf32>,
    return
  }
  func.func @transform_0(%arg0: i32) -> (i32, i32) {
    %c0_i32 = arith.constant 0 : i32
    %c0_i32_0 = arith.constant 0 : i32
    return %c0_i32, %arg0 : i32, i32
  }
  func.func @transform_1(%arg0: i32) -> (i32, i32) {
    %c0_i32 = arith.constant 0 : i32
    %c0_i32_0 = arith.constant 0 : i32
    %c0_i32_1 = arith.constant 0 : i32
    return %c0_i32, %c0_i32_0 : i32, i32
  }
  func.func @transform_2(%arg0: i32) -> (i32, i32) {
    %c0_i32 = arith.constant 0 : i32
    %c0_i32_0 = arith.constant 0 : i32
    %c0_i32_1 = arith.constant 0 : i32
    return %c0_i32, %c0_i32_0 : i32, i32
  }
  func.func @transform_3(%arg0: i32) -> (i32, i32) {
    %c0_i32 = arith.constant 0 : i32
    %c0_i32_0 = arith.constant 0 : i32
    %c0_i32_1 = arith.constant 0 : i32
    return %c0_i32, %c0_i32_0 : i32, i32
  }
  func.func @transform_4(%arg0: i32) -> (i32, i32) {
    %c0_i32 = arith.constant 0 : i32
    %c0_i32_0 = arith.constant 0 : i32
    %c0_i32_1 = arith.constant 0 : i32
    return %c0_i32, %c0_i32_0 : i32, i32
  }
  func.func @transform_5(%arg0: i32) -> (i32, i32) {
    %c0_i32 = arith.constant 0 : i32
    %c0_i32_0 = arith.constant 0 : i32
    %c0_i32_1 = arith.constant 0 : i32
    return %c0_i32, %c0_i32_0 : i32, i32
  }
  func.func @transform_6(%arg0: i32) -> (i32, i32) {
    %c0_i32 = arith.constant 0 : i32
    %c0_i32_0 = arith.constant 0 : i32
    %c0_i32_1 = arith.constant 0 : i32
    return %c0_i32, %c0_i32_0 : i32, i32
  }
  func.func @transform_7(%arg0: i32) -> (i32, i32) {
    %c0_i32 = arith.constant 0 : i32
    %c0_i32_0 = arith.constant 0 : i32
    %c0_i32_1 = arith.constant 0 : i32
    return %c0_i32, %c0_i32_0 : i32, i32
  }
  func.func @transform_8(%arg0: i32) -> (i32, i32) {
    %c0_i32 = arith.constant 0 : i32
    %c0_i32_0 = arith.constant 0 : i32
    %c0_i32_1 = arith.constant 0 : i32
    return %c0_i32, %c0_i32_0 : i32, i32
  }
  func.func @transform_9(%arg0: i32) -> (i32, i32) {
    %c0_i32 = arith.constant 0 : i32
    %c0_i32_0 = arith.constant 0 : i32
    %c0_i32_1 = arith.constant 0 : i32
    return %c0_i32, %c0_i32_0 : i32, i32
  }
  func.func @transform_10(%arg0: i32) -> (i32, i32) {
    %c0_i32 = arith.constant 0 : i32
    %c0_i32_0 = arith.constant 0 : i32
    %c0_i32_1 = arith.constant 0 : i32
    return %c0_i32, %c0_i32_0 : i32, i32
  }
  func.func @transform_11(%arg0: i32) -> (i32, i32) {
    %c0_i32 = arith.constant 0 : i32
    %c0_i32_0 = arith.constant 0 : i32
    %c0_i32_1 = arith.constant 0 : i32
    return %c0_i32, %c0_i32_0 : i32, i32
  }
  func.func @transform_12(%arg0: i32) -> (i32, i32) {
    %c0_i32 = arith.constant 0 : i32
    %c0_i32_0 = arith.constant 0 : i32
    %c0_i32_1 = arith.constant 0 : i32
    return %c0_i32, %c0_i32_0 : i32, i32
  }
  func.func @transform_13(%arg0: i32) -> (i32, i32) {
    %c0_i32 = arith.constant 0 : i32
    %c0_i32_0 = arith.constant 0 : i32
    %c0_i32_1 = arith.constant 0 : i32
    return %c0_i32, %c0_i32_0 : i32, i32
  }
  func.func @transform_14(%arg0: i32) -> (i32, i32) {
    %c0_i32 = arith.constant 0 : i32
    %c0_i32_0 = arith.constant 0 : i32
    return %c0_i32, %arg0 : i32, i32
  }
}

</mosaic_0001>

<llo_original>
// kernel: nice_forward.1
$region0: #{nice_forward.1}
  #allocation0 [shape = 'u32[]', space=smem, size = 0x4, offset = 0x4, fixed_abs, tag = 'smem constant byte address 0x4 - core index']
  #allocation1 [shape = 'u32[72,128]{1,0:T(1,128)}', space=vmem, size = 0x9000, scoped, tag = 'internal scratch']
  #allocation2 [shape = 'f32[1,1]{1,0:T(1,128)S(1)}', space=vmem, size = 0x200, scoped, tag = 'scoped memory for nice_forward.1']
  #allocation3 [shape = 'f32[1,1]{1,0:T(1,128)S(1)}', space=vmem, size = 0x200, scoped, tag = 'scoped memory for nice_forward.1']
  %s0 = inlined_call_operand.vmem [shape: f32[2,128], index: 0, kind: input, shape index: {}]
  %s1 = inlined_call_operand.vmem [shape: f32[2,1], index: 1, kind: input, shape index: {}]
  %s2 = inlined_call_operand.vmem [shape: f32[32,1], index: 2, kind: input, shape index: {}]
  %s3 = inlined_call_operand.vmem [shape: f32[32,1], index: 3, kind: input, shape index: {}]
  %s4 = inlined_call_operand.vmem [shape: f32[32,32], index: 4, kind: input, shape index: {}]
  %s5 = inlined_call_operand.vmem [shape: f32[32,1], index: 5, kind: input, shape index: {}]
  %s6 = inlined_call_operand.vmem [shape: f32[32,1], index: 6, kind: input, shape index: {}]
  %s7 = inlined_call_operand.<no memory space> [shape: f32[1,1], index: 7, kind: input, shape index: {}]
  %s8 = inlined_call_operand.vmem [shape: f32[32,1], index: 8, kind: input, shape index: {}]
  %s9 = inlined_call_operand.vmem [shape: f32[32,1], index: 9, kind: input, shape index: {}]
  %s10 = inlined_call_operand.vmem [shape: f32[32,32], index: 10, kind: input, shape index: {}]
  %s11 = inlined_call_operand.vmem [shape: f32[32,1], index: 11, kind: input, shape index: {}]
  %s12 = inlined_call_operand.vmem [shape: f32[32,1], index: 12, kind: input, shape index: {}]
  %s13 = inlined_call_operand.<no memory space> [shape: f32[1,1], index: 13, kind: input, shape index: {}]
  %s14 = inlined_call_operand.hbm [shape: f32[2,128], index: 14, kind: output, shape index: {}]
  %s15 = sld [smem:[#allocation0]]
  $region66: #{nice_forward.1} parent=0
    _
  %s17 = ssub.s32 1, %s15
  %s18 = scalar_select 0, %s17, %s15
  %v19 = vstv %s7
  %20 = vst [vmem:[#allocation2] sm:$0x1] %v19
  %v21 = vstv %s13
  %22 = vst [vmem:[#allocation3] sm:$0x1] %v21
  $region1: #{nice_forward.1} parent=0
    #allocation4 [shape = 'u8[1024]{0}', space=vmem, size = 0x400, scoped, tag = 'output window, operand 0, single buffered']
    #allocation5 [shape = 's32[1]{0}', space=sflag, size = 0x4, scoped, tag = 'scoped memory for nice_forward.1']
    %23 = vsyncpa [#allocation5], 0
    // Predicated region
    $region2: #{nice_forward.1} parent=1 // pred_check
      _
    $region3: #{nice_forward.1} parent=1 // pred_check_branch
      %25 = sbr.rel (0) target = $region5
    $region4: #{nice_forward.1} parent=1 // pred_region
      _
    $region5: #{nice_forward.1} parent=1 // pred_fallthru
      _
    // Predicated region
    $region6: #{nice_forward.1} parent=1 // pred_check
      _
    $region7: #{nice_forward.1} parent=1 // pred_check_branch
      %27 = sbr.rel (0) target = $region9
    $region8: #{nice_forward.1} parent=1 // pred_region
      _
    $region9: #{nice_forward.1} parent=1 // pred_fallthru
      _
    // Predicated region
    $region10: #{nice_forward.1} parent=1 // pred_check
      _
    $region11: #{nice_forward.1} parent=1 // pred_check_branch
      %29 = sbr.rel (0) target = $region13
    $region12: #{nice_forward.1} parent=1 // pred_region
      _
    $region13: #{nice_forward.1} parent=1 // pred_fallthru
      _
    // Predicated region
    $region14: #{nice_forward.1} parent=1 // pred_check
      _
    $region15: #{nice_forward.1} parent=1 // pred_check_branch
      %31 = sbr.rel (0) target = $region17
    $region16: #{nice_forward.1} parent=1 // pred_region
      _
    $region17: #{nice_forward.1} parent=1 // pred_fallthru
      _
    // Predicated region
    $region18: #{nice_forward.1} parent=1 // pred_check
      _
    $region19: #{nice_forward.1} parent=1 // pred_check_branch
      %33 = sbr.rel (0) target = $region21
    $region20: #{nice_forward.1} parent=1 // pred_region
      _
    $region21: #{nice_forward.1} parent=1 // pred_fallthru
      _
    // Predicated region
    $region22: #{nice_forward.1} parent=1 // pred_check
      _
    $region23: #{nice_forward.1} parent=1 // pred_check_branch
      %35 = sbr.rel (0) target = $region25
    $region24: #{nice_forward.1} parent=1 // pred_region
      _
    $region25: #{nice_forward.1} parent=1 // pred_fallthru
      _
    // Predicated region
    $region26: #{nice_forward.1} parent=1 // pred_check
      _
    $region27: #{nice_forward.1} parent=1 // pred_check_branch
      %37 = sbr.rel (0) target = $region29
    $region28: #{nice_forward.1} parent=1 // pred_region
      _
    $region29: #{nice_forward.1} parent=1 // pred_fallthru
      _
    // Predicated region
    $region30: #{nice_forward.1} parent=1 // pred_check
      _
    $region31: #{nice_forward.1} parent=1 // pred_check_branch
      %39 = sbr.rel (0) target = $region33
    $region32: #{nice_forward.1} parent=1 // pred_region
      _
    $region33: #{nice_forward.1} parent=1 // pred_fallthru
      _
    // Predicated region
    $region34: #{nice_forward.1} parent=1 // pred_check
      _
    $region35: #{nice_forward.1} parent=1 // pred_check_branch
      %41 = sbr.rel (0) target = $region37
    $region36: #{nice_forward.1} parent=1 // pred_region
      _
    $region37: #{nice_forward.1} parent=1 // pred_fallthru
      _
    // Predicated region
    $region38: #{nice_forward.1} parent=1 // pred_check
      _
    $region39: #{nice_forward.1} parent=1 // pred_check_branch
      %43 = sbr.rel (0) target = $region41
    $region40: #{nice_forward.1} parent=1 // pred_region
      _
    $region41: #{nice_forward.1} parent=1 // pred_fallthru
      _
    // Predicated region
    $region42: #{nice_forward.1} parent=1 // pred_check
      _
    $region43: #{nice_forward.1} parent=1 // pred_check_branch
      %45 = sbr.rel (0) target = $region45
    $region44: #{nice_forward.1} parent=1 // pred_region
      _
    $region45: #{nice_forward.1} parent=1 // pred_fallthru
      _
    // Predicated region
    $region46: #{nice_forward.1} parent=1 // pred_check
      _
    $region47: #{nice_forward.1} parent=1 // pred_check_branch
      %47 = sbr.rel (0) target = $region49
    $region48: #{nice_forward.1} parent=1 // pred_region
      _
    $region49: #{nice_forward.1} parent=1 // pred_fallthru
      _
    // Predicated region
    $region50: #{nice_forward.1} parent=1 // pred_check
      _
    $region51: #{nice_forward.1} parent=1 // pred_check_branch
      %49 = sbr.rel (0) target = $region53
    $region52: #{nice_forward.1} parent=1 // pred_region
      _
    $region53: #{nice_forward.1} parent=1 // pred_fallthru
      _
    // Predicated region
    $region54: #{nice_forward.1} parent=1 // pred_check
      _
    $region55: #{nice_forward.1} parent=1 // pred_check_branch
      %51 = sbr.rel (0) target = $region57
    $region56: #{nice_forward.1} parent=1 // pred_region
      _
    $region57: #{nice_forward.1} parent=1 // pred_fallthru
      _
    %v52 = vld [vmem:[%s0] sm:$0x3]
    %v53 = vld [vmem:[%s2] sm:$0xff]
    %v54 = vld [vmem:[%s2 + $0x8] sm:$0xff]
    %v55 = vld [vmem:[%s2 + $0x10] sm:$0xff]
    %v56 = vld [vmem:[%s2 + $0x18] sm:$0xff]
    %v57 = vld [vmem:[%s3] sm:$0xff]
    %v58 = vld [vmem:[%s3 + $0x8] sm:$0xff]
    %v59 = vld [vmem:[%s3 + $0x10] sm:$0xff]
    %v60 = vld [vmem:[%s3 + $0x18] sm:$0xff]
    %v61 = vld [vmem:[%s4] sm:$0xff]
    %v62 = vld [vmem:[%s4 + $0x8] sm:$0xff]
    %v63 = vld [vmem:[%s4 + $0x10] sm:$0xff]
    %v64 = vld [vmem:[%s4 + $0x18] sm:$0xff]
    %v65 = vld [vmem:[%s5] sm:$0xff]
    %v66 = vld [vmem:[%s5 + $0x8] sm:$0xff]
    %v67 = vld [vmem:[%s5 + $0x10] sm:$0xff]
    %v68 = vld [vmem:[%s5 + $0x18] sm:$0xff]
    %v69 = vld [vmem:[%s6] sm:$0xff]
    %v70 = vld [vmem:[%s6 + $0x8] sm:$0xff]
    %v71 = vld [vmem:[%s6 + $0x10] sm:$0xff]
    %v72 = vld [vmem:[%s6 + $0x18] sm:$0xff]
    %v73 = vld [vmem:[#allocation2] sm:$0x1]
    %75 = vset.pattern.permute.xlu0 0
    %76 = vperm.xlu0 %75, %v53
    %v77 = vpop.permute.xlu0 %76
    %80 = vset.pattern.permute.xlu0 0
    %81 = vperm.xlu0 %80, %v54
    %v82 = vpop.permute.xlu0 %81
    %85 = vset.pattern.permute.xlu0 0
    %86 = vperm.xlu0 %85, %v55
    %v87 = vpop.permute.xlu0 %86
    %90 = vset.pattern.permute.xlu0 0
    %91 = vperm.xlu0 %90, %v56
    %v92 = vpop.permute.xlu0 %91
    %v94 = vperm.slane %v52, 0
    %v95 = vmul.f32 %v77, %v94
    %v96 = vmul.f32 %v82, %v94
    %v97 = vmul.f32 %v87, %v94
    %v98 = vmul.f32 %v92, %v94
    %100 = vset.pattern.permute.xlu0 0
    %101 = vperm.xlu0 %100, %v57
    %v102 = vpop.permute.xlu0 %101
    %105 = vset.pattern.permute.xlu0 0
    %106 = vperm.xlu0 %105, %v58
    %v107 = vpop.permute.xlu0 %106
    %110 = vset.pattern.permute.xlu0 0
    %111 = vperm.xlu0 %110, %v59
    %v112 = vpop.permute.xlu0 %111
    %115 = vset.pattern.permute.xlu0 0
    %116 = vperm.xlu0 %115, %v60
    %v117 = vpop.permute.xlu0 %116
    %v119 = vadd.f32 %v95, %v102
    %v120 = vadd.f32 %v96, %v107
    %v121 = vadd.f32 %v97, %v112
    %v122 = vadd.f32 %v98, %v117
    %v123 = vmax.f32 %v119, 0.0
    %v124 = vmax.f32 %v120, 0.0
    %v125 = vmax.f32 %v121, 0.0
    %v126 = vmax.f32 %v122, 0.0
    %128 = vset.pattern.permute.xlu0 0
    %129 = vperm.xlu0 %128, %v65
    %v130 = vpop.permute.xlu0 %129
    %133 = vset.pattern.permute.xlu0 0
    %134 = vperm.xlu0 %133, %v66
    %v135 = vpop.permute.xlu0 %134
    %138 = vset.pattern.permute.xlu0 0
    %139 = vperm.xlu0 %138, %v67
    %v140 = vpop.permute.xlu0 %139
    %143 = vset.pattern.permute.xlu0 0
    %144 = vperm.xlu0 %143, %v68
    %v145 = vpop.permute.xlu0 %144
    %vm147 = vcmask 261120
    %v149 = vsel %vm147, %v61, 0
    %v152 = vsel %vm147, %v62, 0
    %v155 = vsel %vm147, %v63, 0
    %v158 = vsel %vm147, %v64, 0
    %160 = vmatpush.msra.mxu0 0.0
    %161 = vmatpush.msra.mxu0 0.0
    %162 = vmatpush.msra.mxu0 0.0
    %163 = vmatpush.msra.mxu0 0.0
    %164 = vmatpush.msra.mxu0 0.0
    %165 = vmatpush.msra.mxu0 0.0
    %166 = vmatpush.msra.mxu0 0.0
    %167 = vmatpush.msra.mxu0 0.0
    %168 = vmatpush.msra.mxu0 0.0
    %169 = vmatpush.msra.mxu0 0.0
    %170 = vmatpush.msra.mxu0 0.0
    %171 = vmatpush.msra.mxu0 0.0
    %172 = vmatpush.msra.mxu0 %v126
    %173 = vmatpush.msra.mxu0 %v125
    %174 = vmatpush.msra.mxu0 %v124
    %175 = vmatpush.msra.mxu0 %v123
    %176 = vmatmul.f32.gmra.mxu0 %v149
    %v177 = vpop.f32.mrf.mxu0
    %v178 = vadd.f32 %v130, %v177
    %179 = vmatmul.f32.gmra.mxu0 %v152
    %v180 = vpop.f32.mrf.mxu0
    %v181 = vadd.f32 %v135, %v180
    %182 = vmatmul.f32.gmra.mxu0 %v155
    %v183 = vpop.f32.mrf.mxu0
    %v184 = vadd.f32 %v140, %v183
    %185 = vmatmul.f32.gmra.mxu0 %v158
    %v186 = vpop.f32.mrf.mxu0
    %v187 = vadd.f32 %v145, %v186
    %188 = vdwg.mxu0
    %v189 = vmax.f32 %v178, 0.0
    %v190 = vmax.f32 %v181, 0.0
    %v191 = vmax.f32 %v184, 0.0
    %v192 = vmax.f32 %v187, 0.0
    %194 = vset.pattern.permute.xlu0 0
    %195 = vperm.xlu0 %194, %v69
    %v196 = vpop.permute.xlu0 %195
    %199 = vset.pattern.permute.xlu0 0
    %200 = vperm.xlu0 %199, %v70
    %v201 = vpop.permute.xlu0 %200
    %204 = vset.pattern.permute.xlu0 0
    %205 = vperm.xlu0 %204, %v71
    %v206 = vpop.permute.xlu0 %205
    %209 = vset.pattern.permute.xlu0 0
    %210 = vperm.xlu0 %209, %v72
    %v211 = vpop.permute.xlu0 %210
    %v213 = vmul.f32 %v196, %v189
    %v214 = vmul.f32 %v201, %v190
    %v215 = vmul.f32 %v206, %v191
    %v216 = vmul.f32 %v211, %v192
    %v217 = vadd.f32 %v213, %v214
    %v218 = vadd.f32 %v217, %v215
    %v219 = vadd.f32 %v218, %v216
    %v220 = vrot.slane %v219, 4
    %v221 = vadd.f32 %v219, %v220
    %v222 = vrot.slane %v221, 2
    %v223 = vadd.f32 %v221, %v222
    %v224 = vrot.slane %v223, 1
    %v225 = vadd.f32 %v223, %v224
    %227 = vset.pattern.permute.xlu0 0
    %228 = vperm.xlu0 %227, %v73
    %v229 = vpop.permute.xlu0 %228
    %v231 = vperm.slane %v229, 0
    %v232 = vadd.f32 %v225, %v231
    %v233 = vadd.f32 %v52, %v232
    %v234 = vld [vmem:[%s8] sm:$0xff]
    %v235 = vld [vmem:[%s8 + $0x8] sm:$0xff]
    %v236 = vld [vmem:[%s8 + $0x10] sm:$0xff]
    %v237 = vld [vmem:[%s8 + $0x18] sm:$0xff]
    %v238 = vld [vmem:[%s9] sm:$0xff]
    %v239 = vld [vmem:[%s9 + $0x8] sm:$0xff]
    %v240 = vld [vmem:[%s9 + $0x10] sm:$0xff]
    %v241 = vld [vmem:[%s9 + $0x18] sm:$0xff]
    %v242 = vld [vmem:[%s10] sm:$0xff]
    %v243 = vld [vmem:[%s10 + $0x8] sm:$0xff]
    %v244 = vld [vmem:[%s10 + $0x10] sm:$0xff]
    %v245 = vld [vmem:[%s10 + $0x18] sm:$0xff]
    %v246 = vld [vmem:[%s11] sm:$0xff]
    %v247 = vld [vmem:[%s11 + $0x8] sm:$0xff]
    %v248 = vld [vmem:[%s11 + $0x10] sm:$0xff]
    %v249 = vld [vmem:[%s11 + $0x18] sm:$0xff]
    %v250 = vld [vmem:[%s12] sm:$0xff]
    %v251 = vld [vmem:[%s12 + $0x8] sm:$0xff]
    %v252 = vld [vmem:[%s12 + $0x10] sm:$0xff]
    %v253 = vld [vmem:[%s12 + $0x18] sm:$0xff]
    %v254 = vld [vmem:[#allocation3] sm:$0x1]
    %256 = vset.pattern.permute.xlu0 0
    %257 = vperm.xlu0 %256, %v234
    %v258 = vpop.permute.xlu0 %257
    %261 = vset.pattern.permute.xlu0 0
    %262 = vperm.xlu0 %261, %v235
    %v263 = vpop.permute.xlu0 %262
    %266 = vset.pattern.permute.xlu0 0
    %267 = vperm.xlu0 %266, %v236
    %v268 = vpop.permute.xlu0 %267
    %271 = vset.pattern.permute.xlu0 0
    %272 = vperm.xlu0 %271, %v237
    %v273 = vpop.permute.xlu0 %272
    %v275 = vperm.slane %v233, 1
    %v276 = vmul.f32 %v258, %v275
    %v277 = vmul.f32 %v263, %v275
    %v278 = vmul.f32 %v268, %v275
    %v279 = vmul.f32 %v273, %v275
    %281 = vset.pattern.permute.xlu0 0
    %282 = vperm.xlu0 %281, %v238
    %v283 = vpop.permute.xlu0 %282
    %286 = vset.pattern.permute.xlu0 0
    %287 = vperm.xlu0 %286, %v239
    %v288 = vpop.permute.xlu0 %287
    %291 = vset.pattern.permute.xlu0 0
    %292 = vperm.xlu0 %291, %v240
    %v293 = vpop.permute.xlu0 %292
    %296 = vset.pattern.permute.xlu0 0
    %297 = vperm.xlu0 %296, %v241
    %v298 = vpop.permute.xlu0 %297
    %v300 = vadd.f32 %v276, %v283
    %v301 = vadd.f32 %v277, %v288
    %v302 = vadd.f32 %v278, %v293
    %v303 = vadd.f32 %v279, %v298
    %v304 = vmax.f32 %v300, 0.0
    %v305 = vmax.f32 %v301, 0.0
    %v306 = vmax.f32 %v302, 0.0
    %v307 = vmax.f32 %v303, 0.0
    %309 = vset.pattern.permute.xlu0 0
    %310 = vperm.xlu0 %309, %v246
    %v311 = vpop.permute.xlu0 %310
    %314 = vset.pattern.permute.xlu0 0
    %315 = vperm.xlu0 %314, %v247
    %v316 = vpop.permute.xlu0 %315
    %319 = vset.pattern.permute.xlu0 0
    %320 = vperm.xlu0 %319, %v248
    %v321 = vpop.permute.xlu0 %320
    %324 = vset.pattern.permute.xlu0 0
    %325 = vperm.xlu0 %324, %v249
    %v326 = vpop.permute.xlu0 %325
    %v329 = vsel %vm147, %v242, 0
    %v332 = vsel %vm147, %v243, 0
    %v335 = vsel %vm147, %v244, 0
    %v338 = vsel %vm147, %v245, 0
    %340 = vmatpush.msra.mxu0 0.0
    %341 = vmatpush.msra.mxu0 0.0
    %342 = vmatpush.msra.mxu0 0.0
    %343 = vmatpush.msra.mxu0 0.0
    %344 = vmatpush.msra.mxu0 0.0
    %345 = vmatpush.msra.mxu0 0.0
    %346 = vmatpush.msra.mxu0 0.0
    %347 = vmatpush.msra.mxu0 0.0
    %348 = vmatpush.msra.mxu0 0.0
    %349 = vmatpush.msra.mxu0 0.0
    %350 = vmatpush.msra.mxu0 0.0
    %351 = vmatpush.msra.mxu0 0.0
    %352 = vmatpush.msra.mxu0 %v307
    %353 = vmatpush.msra.mxu0 %v306
    %354 = vmatpush.msra.mxu0 %v305
    %355 = vmatpush.msra.mxu0 %v304
    %356 = vmatmul.f32.gmra.mxu0 %v329
    %v357 = vpop.f32.mrf.mxu0
    %v358 = vadd.f32 %v311, %v357
    %359 = vmatmul.f32.gmra.mxu0 %v332
    %v360 = vpop.f32.mrf.mxu0
    %v361 = vadd.f32 %v316, %v360
    %362 = vmatmul.f32.gmra.mxu0 %v335
    %v363 = vpop.f32.mrf.mxu0
    %v364 = vadd.f32 %v321, %v363
    %365 = vmatmul.f32.gmra.mxu0 %v338
    %v366 = vpop.f32.mrf.mxu0
    %v367 = vadd.f32 %v326, %v366
    %368 = vdwg.mxu0
    %v369 = vmax.f32 %v358, 0.0
    %v370 = vmax.f32 %v361, 0.0
    %v371 = vmax.f32 %v364, 0.0
    %v372 = vmax.f32 %v367, 0.0
    %374 = vset.pattern.permute.xlu0 0
    %375 = vperm.xlu0 %374, %v250
    %v376 = vpop.permute.xlu0 %375
    %379 = vset.pattern.permute.xlu0 0
    %380 = vperm.xlu0 %379, %v251
    %v381 = vpop.permute.xlu0 %380
    %384 = vset.pattern.permute.xlu0 0
    %385 = vperm.xlu0 %384, %v252
    %v386 = vpop.permute.xlu0 %385
    %389 = vset.pattern.permute.xlu0 0
    %390 = vperm.xlu0 %389, %v253
    %v391 = vpop.permute.xlu0 %390
    %v393 = vmul.f32 %v376, %v369
    %v394 = vmul.f32 %v381, %v370
    %v395 = vmul.f32 %v386, %v371
    %v396 = vmul.f32 %v391, %v372
    %v397 = vadd.f32 %v393, %v394
    %v398 = vadd.f32 %v397, %v395
    %v399 = vadd.f32 %v398, %v396
    %v400 = vrot.slane %v399, 4
    %v401 = vadd.f32 %v399, %v400
    %v402 = vrot.slane %v401, 2
    %v403 = vadd.f32 %v401, %v402
    %v404 = vrot.slane %v403, 1
    %v405 = vadd.f32 %v403, %v404
    %407 = vset.pattern.permute.xlu0 0
    %408 = vperm.xlu0 %407, %v254
    %v409 = vpop.permute.xlu0 %408
    %v411 = vperm.slane %v409, 0
    %v412 = vadd.f32 %v405, %v411
    %v413 = vadd.f32 %v52, %v412
    %vm414 = vcmask 1040384
    %v415 = vsel %vm414, %v413, %v233
    %v416 = vld [vmem:[%s1] sm:$0x3]
    %418 = vset.pattern.permute.xlu0 0
    %419 = vperm.xlu0 %418, %v416
    %v420 = vpop.permute.xlu0 %419
    %v422 = vmul.f32 %v415, %v420
    %423 = vst [vmem:[#allocation4] sm:$0x3] %v422
    // Predicated region
    $region58: #{nice_forward.1} parent=1 // pred_check
      _
    $region59: #{nice_forward.1} parent=1 // pred_check_branch
      %425 = sbr.rel (0) target = $region61
    $region60: #{nice_forward.1} parent=1 // pred_region
      %427 = vsyncadd [#allocation5], 0
      %s429 = sshll.u32 [#allocation4], 4
      %s430 = int_to_ptr.vmem [resolvable:$true] %s429
      %s431 = sshll.u32 %s14, 4
      %s432 = int_to_ptr.hbm [resolvable:$true] %s431
      %434 = dma.vmem_to_hbm [thread:$0]  %s430, 32, %s432, [#allocation5]
    $region61: #{nice_forward.1} parent=1 // pred_fallthru
      _
    // Predicated region
    $region62: #{nice_forward.1} parent=1 // pred_check
      _
    $region63: #{nice_forward.1} parent=1 // pred_check_branch
      %436 = sbr.rel (0) target = $region65
    $region64: #{nice_forward.1} parent=1 // pred_region
      %438 = dma.done [#allocation5], 32
    $region65: #{nice_forward.1} parent=1 // pred_fallthru
      _
    %439 = vsyncpa [#allocation5], 1

</llo_original>
